<compile_context>
chip_gen: v7x
topology: tpu7x:2x2x1
jax: 0.10.0
libtpu: 0.0.40
codegen_flags: <defaults>
</compile_context>

<pallas_src>
import functools

import jax
import jax.numpy as jnp
from jax import lax
from jax.experimental import pallas as pl
from jax.experimental.pallas import tpu as pltpu


def _lfq_kernel(x_ref, q_ref, psq_ref, ppos_ref, *,
                scale, need_mask, valid_b, fold, cdim, tile_rows):
    x = x_ref[...]                                    # (TR, W), lane-dense
    tr, w = x.shape

    # quantize: sign(tanh(x)) == sign(x) -> direct select, no tanh (EUP) needed.
    pos = x >= 0
    q_ref[...] = jnp.where(pos, scale, -scale).astype(q_ref.dtype)

    # (x - sign(x)*scale)^2 == (|x| - scale)^2  (exact for any scale sign)
    d = jnp.abs(x).astype(jnp.float32) - jnp.float32(scale)
    sq = d * d
    pos_f = pos.astype(jnp.float32)

    if need_mask:
        # Zero the contribution of rows that only exist because of padding.
        # element (r, j) of the reshaped array is original row r*fold + j//cdim.
        row = lax.broadcasted_iota(jnp.int32, (tr, w), 0)
        orig_row = (pl.program_id(0) * tile_rows + row) * fold
        if fold > 1:
            # fold > 1 implies 128 % cdim == 0, so cdim is a power of two (shift).
            lane = lax.broadcasted_iota(jnp.int32, (tr, w), 1)
            orig_row = orig_row + lane // cdim
        valid = orig_row < valid_b
        sq = jnp.where(valid, sq, 0.0)
        pos_f = jnp.where(valid, pos_f, 0.0)

    # Per-tile partial sums over rows, kept per-column (lane-dense, no cross-lane
    # reduce in-kernel). Row 0 of each (8, W) block holds the partial; the rest is
    # zero so the wrapper can simply sum everything.
    psq_ref[...] = jnp.zeros((8, w), jnp.float32)
    ppos_ref[...] = jnp.zeros((8, w), jnp.float32)
    psq_ref[0:1, :] = jnp.sum(sq, axis=0, keepdims=True)
    ppos_ref[0:1, :] = jnp.sum(pos_f, axis=0, keepdims=True)


def lfq_forward(x, *, scale=1.0, commit_loss_weight=0.1,
                codebook_loss_weight=0.1, entropy_loss_weight=0.001,
                tile_bytes=2 * 1024 * 1024):
    """Pallas LFQ.forward. Returns (quantized, total_loss, loss_breakdown).

    tile_bytes: ~2 MiB f32 tiles are safe on v5e/v6e/v7x (double-buffered in+out
    stays well under the 16 MiB v5e scoped-VMEM default). On v6e (128 MiB VMEM)
    ~8 MiB and on v7x (64 MiB VMEM) ~4 MiB amortize per-step overhead a bit more.
    """
    B, C = x.shape
    itemsize = jnp.dtype(x.dtype).itemsize

    # Lane-dense fold: [B, C] -> [rows, fold*C] with fold*C == 128 when C | 128.
    if C <= 128 and 128 % C == 0:
        fold = 128 // C
    else:
        fold = 1                                      # fallback: keep [B, C]
    W = fold * C

    rows = -(-B // fold)
    # Largest multiple-of-8 row tile that keeps one f32 tile under tile_bytes.
    max_tr = max(8, (tile_bytes // (W * 4)) // 8 * 8)
    TR = min(max_tr, -(-rows // 8) * 8)
    G = -(-rows // TR)
    rows_pad = G * TR
    B_pad = rows_pad * fold
    need_mask = (B_pad != B)

    x_in = x if not need_mask else jnp.pad(x, ((0, B_pad - B), (0, 0)))
    x2 = x_in.reshape(rows_pad, W)

    kernel = functools.partial(
        _lfq_kernel, scale=float(scale), need_mask=need_mask,
        valid_b=B, fold=fold, cdim=C, tile_rows=TR)

    n_elems = rows_pad * W
    cost = pl.CostEstimate(
        flops=6 * n_elems,
        transcendentals=0,
        bytes_accessed=2 * n_elems * itemsize + 2 * G * 8 * W * 4)

    q2, psq, ppos = pl.pallas_call(
        kernel,
        grid=(G,),
        in_specs=[pl.BlockSpec((TR, W), lambda i: (i, 0))],
        out_specs=(
            pl.BlockSpec((TR, W), lambda i: (i, 0)),
            pl.BlockSpec((8, W), lambda i: (i, 0)),
            pl.BlockSpec((8, W), lambda i: (i, 0)),
        ),
        out_shape=(
            jax.ShapeDtypeStruct((rows_pad, W), x.dtype),
            jax.ShapeDtypeStruct((G * 8, W), jnp.float32),
            jax.ShapeDtypeStruct((G * 8, W), jnp.float32),
        ),
        compiler_params=pltpu.CompilerParams(
            dimension_semantics=("parallel",),        # no carried state -> dual-TC on v7x
            vmem_limit_bytes=32 * 1024 * 1024),
        cost_estimate=cost,
    )(x2)

    quantized = q2.reshape(B_pad, C)
    if need_mask:
        quantized = quantized[:B]

    # Tiny finalize on the partials in plain JAX (a handful of small ops), which
    # keeps the kernel's grid axis fully parallel.
    mse = jnp.sum(psq) / jnp.float32(B * C)
    commit_loss = (mse * commit_loss_weight if commit_loss_weight > 0
                   else jnp.float32(0.0))
    codebook_loss = (mse * codebook_loss_weight if codebook_loss_weight > 0
                     else jnp.float32(0.0))

    if entropy_loss_weight > 0:
        eps = 1e-8
        # column j of the reshaped layout is original dim (j % C)
        pos_counts = jnp.sum(ppos, axis=0).reshape(fold, C).sum(axis=0)   # (C,)
        pos_prob = pos_counts / jnp.float32(B)
        neg_prob = 1.0 - pos_prob
        pos_prob = jnp.clip(pos_prob, eps, 1.0 - eps)
        neg_prob = jnp.clip(neg_prob, eps, 1.0 - eps)
        ent = -(pos_prob * jnp.log2(pos_prob) + neg_prob * jnp.log2(neg_prob))
        entropy_loss = jnp.clip(1.0 - jnp.mean(ent), 0.0, 1.0) * entropy_loss_weight
    else:
        entropy_loss = jnp.float32(0.0)

    total_loss = commit_loss + codebook_loss + entropy_loss
    breakdown = {"commit_loss": commit_loss,
                 "codebook_loss": codebook_loss,
                 "entropy_loss": entropy_loss}
    return quantized, total_loss, breakdown


def _lfq_reference(x, *, scale=1.0, commit_w=0.1, codebook_w=0.1, entropy_w=0.001):
    """Pure-JAX reference mirroring the PyTorch module (forward values, with tanh)."""
    t = jnp.tanh(x)
    q = jnp.where(t >= 0, 1.0, -1.0) * scale
    mse = jnp.mean((x - q) ** 2)
    commit = mse * commit_w if commit_w > 0 else jnp.float32(0.0)
    codebook = mse * codebook_w if codebook_w > 0 else jnp.float32(0.0)
    if entropy_w > 0:
        eps = 1e-8
        pos = jnp.mean((q / scale > 0).astype(jnp.float32), axis=0)
        neg = 1.0 - pos
        pos = jnp.clip(pos, eps, 1 - eps)
        neg = jnp.clip(neg, eps, 1 - eps)
        ent = -(pos * jnp.log2(pos) + neg * jnp.log2(neg))
        entropy = jnp.clip(1.0 - jnp.mean(ent), 0.0, 1.0) * entropy_w
    else:
        entropy = jnp.float32(0.0)
    total = commit + codebook + entropy
    return q, total, {"commit_loss": commit, "codebook_loss": codebook,
                      "entropy_loss": entropy}


if __name__ == "__main__":
    # LFQ(codebook_dim=16) -> codebook_size = 2**16
    codebook_dim = 16
    B = 64

    key = jax.random.PRNGKey(0)
    x = jax.random.normal(key, (B, codebook_dim), dtype=jnp.float32)

    quantized, total_loss, breakdown = lfq_forward(x)
    jax.block_until_ready(quantized)
    jax.block_until_ready(total_loss)

    q_ref, total_ref, bd_ref = _lfq_reference(x)
    assert quantized.shape == (B, codebook_dim)
    assert jnp.allclose(quantized, q_ref, atol=1e-6), "quantized mismatch"
    assert jnp.allclose(total_loss, total_ref, rtol=1e-5, atol=1e-7), "loss mismatch"
    for k in bd_ref:
        assert jnp.allclose(breakdown[k], bd_ref[k], rtol=1e-5, atol=1e-7), k

    # Exercise the padded / masked path (B not a multiple of the fold factor).
    x_odd = jax.random.normal(jax.random.PRNGKey(1), (37, codebook_dim), jnp.float32)
    q_o, t_o, _ = lfq_forward(x_odd)
    jax.block_until_ready(q_o)
    qr_o, tr_o, _ = _lfq_reference(x_odd)
    assert q_o.shape == (37, codebook_dim)
    assert jnp.allclose(q_o, qr_o, atol=1e-6), "quantized mismatch (padded path)"
    assert jnp.allclose(t_o, tr_o, rtol=1e-5, atol=1e-6), "loss mismatch (padded path)"

    print("KERNEL_OK")
</pallas_src>

<mosaic_0001>
module attributes {stable_mosaic.version = 11 : i64} {
  func.func @_lfq_kernel(%arg0: i32, %arg1: memref<8x128xf32, #tpu.memory_space<vmem>>, %arg2: memref<8x128xf32, #tpu.memory_space<vmem>>, %arg3: memref<8x128xf32, #tpu.memory_space<vmem>>, %arg4: memref<8x128xf32, #tpu.memory_space<vmem>>) attributes {dimension_semantics = [#tpu.dimension_semantics<parallel>], iteration_bounds = array<i64: 1>, scalar_prefetch = 0 : i64, scratch_operands = 0 : i64, tpu.core_type = #tpu.core_type<tc>, window_params = [{transform_indices = @transform_0, window_bounds = array<i64: 8, 128>}, {transform_indices = @transform_1, window_bounds = array<i64: 8, 128>}, {transform_indices = @transform_2, window_bounds = array<i64: 8, 128>}, {transform_indices = @transform_3, window_bounds = array<i64: 8, 128>}]} {
    %c0 = arith.constant 0 : index
    %c0_0 = arith.constant 0 : index
    %0 = vector.load %arg1[%c0, %c0_0] : memref<8x128xf32, #tpu.memory_space<vmem>>, vector<8x128xf32>
    %cst = arith.constant 0.000000e+00 : f32
    %1 = vector.broadcast %cst : f32 to vector<8x128xf32>
    %2 = arith.cmpf oge, %0, %1 : vector<8x128xf32>
    %cst_1 = arith.constant 1.000000e+00 : f32
    %cst_2 = arith.constant -1.000000e+00 : f32
    %3 = vector.broadcast %cst_1 : f32 to vector<8x128xf32>
    %4 = vector.broadcast %cst_2 : f32 to vector<8x128xf32>
    %5 = arith.select %2, %3, %4 : vector<8x128xi1>, vector<8x128xf32>
    %c0_3 = arith.constant 0 : index
    %c0_4 = arith.constant 0 : index
    %6 = vector.load %arg2[%c0_3, %c0_4] : memref<8x128xf32, #tpu.memory_space<vmem>>, vector<8x128xf32>
    tpu.vector_store %arg2[%c0_3, %c0_4], %5 {strides = array<i32>} : memref<8x128xf32, #tpu.memory_space<vmem>>, vector<8x128xf32>,
    %7 = math.absf %0 : vector<8x128xf32>
    %cst_5 = arith.constant 1.000000e+00 : f32
    %8 = vector.broadcast %cst_5 : f32 to vector<8x128xf32>
    %9 = arith.subf %7, %8 : vector<8x128xf32>
    %10 = arith.mulf %9, %9 : vector<8x128xf32>
    %11 = arith.extui %2 : vector<8x128xi1> to vector<8x128xi32>
    %12 = arith.sitofp %11 : vector<8x128xi32> to vector<8x128xf32>
    %cst_6 = arith.constant 0.000000e+00 : f32
    %13 = vector.broadcast %cst_6 : f32 to vector<8x128xf32>
    %c0_7 = arith.constant 0 : index
    %c0_8 = arith.constant 0 : index
    %14 = vector.load %arg3[%c0_7, %c0_8] : memref<8x128xf32, #tpu.memory_space<vmem>>, vector<8x128xf32>
    tpu.vector_store %arg3[%c0_7, %c0_8], %13 {strides = array<i32>} : memref<8x128xf32, #tpu.memory_space<vmem>>, vector<8x128xf32>,
    %cst_9 = arith.constant 0.000000e+00 : f32
    %15 = vector.broadcast %cst_9 : f32 to vector<8x128xf32>
    %c0_10 = arith.constant 0 : index
    %c0_11 = arith.constant 0 : index
    %16 = vector.load %arg4[%c0_10, %c0_11] : memref<8x128xf32, #tpu.memory_space<vmem>>, vector<8x128xf32>
    tpu.vector_store %arg4[%c0_10, %c0_11], %15 {strides = array<i32>} : memref<8x128xf32, #tpu.memory_space<vmem>>, vector<8x128xf32>,
    %cst_12 = arith.constant dense<0.000000e+00> : vector<128xf32>
    %17 = vector.multi_reduction <add>, %10, %cst_12 [0] : vector<8x128xf32> to vector<128xf32>
    %18 = vector.shape_cast %17 : vector<128xf32> to vector<1x128xf32>
    %c0_13 = arith.constant 0 : index
    %c0_14 = arith.constant 0 : index
    %19 = vector.load %arg3[%c0_13, %c0_14] : memref<8x128xf32, #tpu.memory_space<vmem>>, vector<1x128xf32>
    tpu.vector_store %arg3[%c0_13, %c0_14], %18 {strides = array<i32>} : memref<8x128xf32, #tpu.memory_space<vmem>>, vector<1x128xf32>,
    %cst_15 = arith.constant dense<0.000000e+00> : vector<128xf32>
    %20 = vector.multi_reduction <add>, %12, %cst_15 [0] : vector<8x128xf32> to vector<128xf32>
    %21 = vector.shape_cast %20 : vector<128xf32> to vector<1x128xf32>
    %c0_16 = arith.constant 0 : index
    %c0_17 = arith.constant 0 : index
    %22 = vector.load %arg4[%c0_16, %c0_17] : memref<8x128xf32, #tpu.memory_space<vmem>>, vector<1x128xf32>
    tpu.vector_store %arg4[%c0_16, %c0_17], %21 {strides = array<i32>} : memref<8x128xf32, #tpu.memory_space<vmem>>, vector<1x128xf32>,
    return
  }
  func.func @transform_0(%arg0: i32) -> (i32, i32) {
    %c0_i32 = arith.constant 0 : i32
    %c0_i32_0 = arith.constant 0 : i32
    return %arg0, %c0_i32 : i32, i32
  }
  func.func @transform_1(%arg0: i32) -> (i32, i32) {
    %c0_i32 = arith.constant 0 : i32
    %c0_i32_0 = arith.constant 0 : i32
    return %arg0, %c0_i32 : i32, i32
  }
  func.func @transform_2(%arg0: i32) -> (i32, i32) {
    %c0_i32 = arith.constant 0 : i32
    %c0_i32_0 = arith.constant 0 : i32
    return %arg0, %c0_i32 : i32, i32
  }
  func.func @transform_3(%arg0: i32) -> (i32, i32) {
    %c0_i32 = arith.constant 0 : i32
    %c0_i32_0 = arith.constant 0 : i32
    return %arg0, %c0_i32 : i32, i32
  }
}

</mosaic_0001>

<llo_original>
// kernel: tpu_custom_call.1
$region0: #{tpu_custom_call.1}
  #allocation0 [shape = 'u32[]', space=smem, size = 0x4, offset = 0x4, fixed_abs, tag = 'smem constant byte address 0x4 - core index']
  #allocation1 [shape = 'u32[144,128]{1,0:T(1,128)}', space=vmem, size = 0x12000, scoped, tag = 'internal scratch']
  %s0 = inlined_call_operand.hbm [shape: f32[8,128], index: 0, kind: input, shape index: {}]
  %s1 = inlined_call_operand.hbm [shape: f32[8,128], index: 1, kind: output, shape index: {0}]
  %s2 = inlined_call_operand.hbm [shape: f32[8,128], index: 2, kind: output, shape index: {1}]
  %s3 = inlined_call_operand.hbm [shape: f32[8,128], index: 3, kind: output, shape index: {2}]
  %4 = xla_tuple %s1, %s2, %s3
  %s5 = sld [smem:[#allocation0]]
  $region34: #{tpu_custom_call.1} parent=0
    _
  %s7 = ssub.s32 1, %s5
  %s8 = scalar_select 0, %s7, %s5
  $region1: #{tpu_custom_call.1} parent=0
    #allocation2 [shape = 'u8[4096]{0}', space=vmem, size = 0x1000, scoped, tag = 'input window, operand 0, single buffered']
    #allocation3 [shape = 's32[1]{0}', space=sflag, size = 0x4, scoped, tag = 'scoped memory for tpu_custom_call.1']
    #allocation4 [shape = 's32[1]{0}', space=sflag, size = 0x4, scoped, tag = 'scoped memory for tpu_custom_call.1']
    #allocation5 [shape = 'u8[4096]{0}', space=vmem, size = 0x1000, scoped, tag = 'output window, operand 0, single buffered']
    #allocation6 [shape = 'u8[4096]{0}', space=vmem, size = 0x1000, scoped, tag = 'output window, operand 1, single buffered']
    #allocation7 [shape = 's32[1]{0}', space=sflag, size = 0x4, scoped, tag = 'scoped memory for tpu_custom_call.1']
    #allocation8 [shape = 'u8[4096]{0}', space=vmem, size = 0x1000, scoped, tag = 'output window, operand 2, single buffered']
    %9 = vsyncpa [#allocation3], 0
    %10 = vsyncpa [#allocation4], 0
    %11 = vsyncpa [#allocation7], 0
    // Predicated region
    $region2: #{tpu_custom_call.1} parent=1 // pred_check
      _
    $region3: #{tpu_custom_call.1} parent=1 // pred_check_branch
      %13 = sbr.rel (0) target = $region5
    $region4: #{tpu_custom_call.1} parent=1 // pred_region
      %s15 = ssub.s32 128, 128
      %16 = vsyncadd [#allocation3], %s15
      %s18 = sshll.u32 [#allocation2], 4
      %s19 = int_to_ptr.vmem [resolvable:$true] %s18
      %21 = dma.hbm_to_vmem [thread:$0]  %s0, 128, %s19, [#allocation3]
    $region5: #{tpu_custom_call.1} parent=1 // pred_fallthru
      _
    // Predicated region
    $region6: #{tpu_custom_call.1} parent=1 // pred_check
      _
    $region7: #{tpu_custom_call.1} parent=1 // pred_check_branch
      %23 = sbr.rel (0) target = $region9
    $region8: #{tpu_custom_call.1} parent=1 // pred_region
      %24 = dma.done [#allocation3], 128
    $region9: #{tpu_custom_call.1} parent=1 // pred_fallthru
      _
    %v25 = vld [vmem:[#allocation2] sm:$0xff]
    %vm26 = vcmp.ge.f32.partialorder %v25, 0.0
    %v27 = vsel %vm26, 1.0, -1.0
    %28 = vst [vmem:[#allocation5] sm:$0xff] %v27
    %v29 = vand.u32 2147483647, %v25
    %v30 = vsub.f32 %v29, 1.0
    %v31 = vmul.f32 %v30, %v30
    %v32 = vsel %vm26, 1, 0
    %v33 = vcvt.s32.f32 %v32
    %34 = vst [vmem:[#allocation6] sm:$0xff] 0.0
    %35 = vst [vmem:[#allocation8] sm:$0xff] 0.0
    %v36 = vrot.slane %v31, 4
    %v37 = vadd.f32 %v31, %v36
    %v38 = vrot.slane %v37, 2
    %v39 = vadd.f32 %v37, %v38
    %v40 = vrot.slane %v39, 1
    %v41 = vadd.f32 %v39, %v40
    %42 = vst [vmem:[#allocation6] sm:$0x1] %v41
    %v43 = vrot.slane %v33, 4
    %v44 = vadd.f32 %v33, %v43
    %v45 = vrot.slane %v44, 2
    %v46 = vadd.f32 %v44, %v45
    %v47 = vrot.slane %v46, 1
    %v48 = vadd.f32 %v46, %v47
    %49 = vst [vmem:[#allocation8] sm:$0x1] %v48
    // Predicated region
    $region10: #{tpu_custom_call.1} parent=1 // pred_check
      _
    $region11: #{tpu_custom_call.1} parent=1 // pred_check_branch
      %51 = sbr.rel (0) target = $region13
    $region12: #{tpu_custom_call.1} parent=1 // pred_region
      %s53 = ssub.s32 128, 128
      %54 = vsyncadd [#allocation4], %s53
      %s56 = sshll.u32 [#allocation5], 4
      %s57 = int_to_ptr.vmem [resolvable:$true] %s56
      %59 = dma.vmem_to_hbm [thread:$0]  %s57, 128, %s1, [#allocation4]
    $region13: #{tpu_custom_call.1} parent=1 // pred_fallthru
      _
    // Predicated region
    $region14: #{tpu_custom_call.1} parent=1 // pred_check
      _
    $region15: #{tpu_custom_call.1} parent=1 // pred_check_branch
      %61 = sbr.rel (0) target = $region17
    $region16: #{tpu_custom_call.1} parent=1 // pred_region
      %s63 = ssub.s32 128, 128
      %64 = vsyncadd [#allocation7], %s63
      %s66 = sshll.u32 [#allocation6], 4
      %s67 = int_to_ptr.vmem [resolvable:$true] %s66
      %69 = dma.vmem_to_hbm [thread:$0]  %s67, 128, %s2, [#allocation7]
    $region17: #{tpu_custom_call.1} parent=1 // pred_fallthru
      _
    // Predicated region
    $region18: #{tpu_custom_call.1} parent=1 // pred_check
      _
    $region19: #{tpu_custom_call.1} parent=1 // pred_check_branch
      %71 = sbr.rel (0) target = $region21
    $region20: #{tpu_custom_call.1} parent=1 // pred_region
      %s73 = ssub.s32 128, 128
      %74 = vsyncadd [#allocation7], %s73
      %s76 = sshll.u32 [#allocation8], 4
      %s77 = int_to_ptr.vmem [resolvable:$true] %s76
      %79 = dma.vmem_to_hbm [thread:$0]  %s77, 128, %s3, [#allocation7]
    $region21: #{tpu_custom_call.1} parent=1 // pred_fallthru
      _
    // Predicated region
    $region22: #{tpu_custom_call.1} parent=1 // pred_check
      _
    $region23: #{tpu_custom_call.1} parent=1 // pred_check_branch
      %81 = sbr.rel (0) target = $region25
    $region24: #{tpu_custom_call.1} parent=1 // pred_region
      %82 = dma.done [#allocation4], 128
    $region25: #{tpu_custom_call.1} parent=1 // pred_fallthru
      _
    // Predicated region
    $region26: #{tpu_custom_call.1} parent=1 // pred_check
      _
    $region27: #{tpu_custom_call.1} parent=1 // pred_check_branch
      %84 = sbr.rel (0) target = $region29
    $region28: #{tpu_custom_call.1} parent=1 // pred_region
      %85 = dma.done [#allocation7], 128
    $region29: #{tpu_custom_call.1} parent=1 // pred_fallthru
      _
    // Predicated region
    $region30: #{tpu_custom_call.1} parent=1 // pred_check
      _
    $region31: #{tpu_custom_call.1} parent=1 // pred_check_branch
      %87 = sbr.rel (0) target = $region33
    $region32: #{tpu_custom_call.1} parent=1 // pred_region
      %88 = dma.done [#allocation7], 128
    $region33: #{tpu_custom_call.1} parent=1 // pred_fallthru
      _
    %89 = vsyncpa [#allocation3], 1
    %90 = vsyncpa [#allocation4], 1
    %91 = vsyncpa [#allocation7], 1

</llo_original>
